<compile_context>
chip_gen: v7x
topology: tpu7x:2x2x1
jax: 0.10.0
libtpu: 0.0.40
codegen_flags: <defaults>
</compile_context>

<pallas_src>
import functools

import jax
import jax.numpy as jnp
from jax import lax
from jax.experimental import pallas as pl
from jax.experimental.pallas import tpu as pltpu

_LANE = 128          # TPU lane width: padded output width
_H_PAD = 128         # padded hidden width (fc1_units / fc2_units <= 128)
_TM_MAX = 2048       # max batch-tile rows
_NEG = -1e30         # fill for invalid output lanes (argmax-safe)


# ---------------------------------------------------------------------------
# Kernel
# ---------------------------------------------------------------------------
def _qnet_kernel(dueling_agent, action_size,
                 x_ref, w1_ref, w2_ref, w3_ref, b_ref, out_ref):
    # x: [TM, S] f32; weights: bf16 (padded); biases packed [3, 128] f32.
    x = x_ref[...].astype(jnp.bfloat16)

    b1 = b_ref[0:1, :]
    b2 = b_ref[1:2, :]
    b3 = b_ref[2:3, :]

    # fc1 + relu  (MXU bf16 operands, f32 accumulate; elementwise stays f32)
    h1 = jnp.dot(x, w1_ref[...], preferred_element_type=jnp.float32) + b1
    h1 = jnp.maximum(h1, 0.0)

    # fc2 + relu
    h2 = jnp.dot(h1.astype(jnp.bfloat16), w2_ref[...],
                 preferred_element_type=jnp.float32) + b2
    h2 = jnp.maximum(h2, 0.0)

    # fc3 (+ fused state_value column when dueling)
    y = jnp.dot(h2.astype(jnp.bfloat16), w3_ref[...],
                preferred_element_type=jnp.float32) + b3

    if dueling_agent:
        # value head output lives in column `action_size`; broadcast-add it.
        v = y[:, action_size:action_size + 1]          # [TM, 1]
        y = y + v

    # Mask lanes >= action_size so the padded output is directly consumable
    # (argmax / gather) without a wrapper slice.  One cheap VPU select.
    lane = lax.broadcasted_iota(jnp.int32, (1, _LANE), 1)
    y = jnp.where(lane < action_size, y, jnp.float32(_NEG))

    out_ref[...] = y.astype(out_ref.dtype)


# ---------------------------------------------------------------------------
# Parameter init + one-time packing
# ---------------------------------------------------------------------------
def init_qnet_params(key, state_size, action_size, fc1_units=64, fc2_units=64):
    """Mirror PyTorch nn.Linear default init: U(-1/sqrt(fan_in), 1/sqrt(fan_in)).
    Weights stored as [in, out] (transposed vs nn.Linear.weight)."""
    def linear(k, fan_in, fan_out):
        kw, kb = jax.random.split(k)
        bound = 1.0 / jnp.sqrt(fan_in)
        w = jax.random.uniform(kw, (fan_in, fan_out), jnp.float32, -bound, bound)
        b = jax.random.uniform(kb, (1, fan_out), jnp.float32, -bound, bound)
        return w, b

    k1, k2, k3, k4 = jax.random.split(key, 4)
    w1, b1 = linear(k1, state_size, fc1_units)
    w2, b2 = linear(k2, fc1_units, fc2_units)
    w3, b3 = linear(k3, fc2_units, action_size)
    wv, bv = linear(k4, fc2_units, 1)
    return dict(w1=w1, b1=b1, w2=w2, b2=b2, w3=w3, b3=b3, wv=wv, bv=bv)


def prepare_qnet_params(params, action_size, dueling_agent=False):
    """Pack / pad raw params for the kernel.  Done once, outside the kernel."""
    def pad2(a, rows, cols):
        r, c = a.shape
        return jnp.pad(a, ((0, rows - r), (0, cols - c)))

    w1, b1 = params["w1"], params["b1"]
    w2, b2 = params["w2"], params["b2"]
    w3, b3 = params["w3"], params["b3"]
    S, F1 = w1.shape
    F2 = w2.shape[1]
    assert F1 <= _H_PAD and F2 <= _H_PAD and action_size + 1 <= _LANE

    if dueling_agent:
        # Fuse state_value head into fc3: one matmul yields [q | v].
        w3 = jnp.concatenate([w3, params["wv"]], axis=1)   # [F2, A+1]
        b3 = jnp.concatenate([b3, params["bv"]], axis=1)   # [1, A+1]

    w1p = pad2(w1, S, _H_PAD).astype(jnp.bfloat16)          # [S, 128]
    w2p = pad2(w2, _H_PAD, _H_PAD).astype(jnp.bfloat16)     # [128, 128]
    w3p = pad2(w3, _H_PAD, _LANE).astype(jnp.bfloat16)      # [128, 128]

    bias = jnp.stack([
        pad2(b1, 1, _H_PAD)[0],
        pad2(b2, 1, _H_PAD)[0],
        pad2(b3, 1, _LANE)[0],
    ], axis=0).astype(jnp.float32)                           # [3, 128]

    return dict(w1p=w1p, w2p=w2p, w3p=w3p, bias=bias)


# ---------------------------------------------------------------------------
# Tiling: bucketed padded batch + tile choice (>= 2 grid steps for megacore)
# ---------------------------------------------------------------------------
def _round_up(x, m):
    return ((x + m - 1) // m) * m


def _choose_tiling(B, block_rows=None):
    """Return (B_padded, tm).  B_padded is a power-of-2 bucket (<= 2x waste,
    bounded set of compiled shapes); tm <= _TM_MAX and gives >= 2 grid steps
    whenever B_padded >= 16 so v7x megacore sees a shardable batch axis."""
    if B <= _TM_MAX:
        bp = max(8, pl.next_power_of_2(B))
    else:
        bp = _round_up(B, _TM_MAX)
    if block_rows is not None:
        tm = max(8, min(_round_up(block_rows, 8), bp))
    elif bp <= 8:
        tm = bp                      # tiny batch: one step
    else:
        tm = min(_TM_MAX, bp // 2)   # >= 2 steps, big tiles
    assert bp % tm == 0, (bp, tm)
    return bp, tm


# ---------------------------------------------------------------------------
# Plain-XLA path for B == 1 act-time calls (launch overhead > kernel work)
# ---------------------------------------------------------------------------
def _qnet_forward_xla(x, packed, action_size, dueling_agent, out_dtype):
    b1, b2, b3 = (packed["bias"][0:1], packed["bias"][1:2], packed["bias"][2:3])
    h1 = jnp.maximum(jnp.dot(x.astype(jnp.bfloat16), packed["w1p"],
                             preferred_element_type=jnp.float32) + b1, 0.0)
    h2 = jnp.maximum(jnp.dot(h1.astype(jnp.bfloat16), packed["w2p"],
                             preferred_element_type=jnp.float32) + b2, 0.0)
    y = jnp.dot(h2.astype(jnp.bfloat16), packed["w3p"],
                preferred_element_type=jnp.float32) + b3
    if dueling_agent:
        y = y + y[:, action_size:action_size + 1]
    lane = jnp.arange(_LANE)[None, :]
    y = jnp.where(lane < action_size, y, jnp.float32(_NEG))
    return y.astype(out_dtype)


# ---------------------------------------------------------------------------
# Wrapper
# ---------------------------------------------------------------------------
def qnet_forward(x, packed, action_size, dueling_agent=False,
                 out_dtype=jnp.float32, return_padded=False, block_rows=None):
    """x: [B, state_size] f32 -> [B, action_size] (or padded [Bp, 128] if
    return_padded=True; invalid lanes are -1e30 so argmax works directly)."""
    B, S = x.shape
    w1p, w2p, w3p, bias = packed["w1p"], packed["w2p"], packed["w3p"], packed["bias"]

    if B == 1 and block_rows is None:
        y = _qnet_forward_xla(x, packed, action_size, dueling_agent, out_dtype)
        return y if return_padded else y[:, :action_size]

    bp, tm = _choose_tiling(B, block_rows)
    if bp != B:
        x = jnp.pad(x, ((0, bp - B), (0, 0)))
    grid = (bp // tm,)

    kernel = functools.partial(_qnet_kernel, dueling_agent, action_size)

    def resident(a):
        return pl.BlockSpec(a.shape, lambda i: (0,) * a.ndim)

    out_padded = pl.pallas_call(
        kernel,
        out_shape=jax.ShapeDtypeStruct((bp, _LANE), out_dtype),
        grid=grid,
        in_specs=[
            pl.BlockSpec((tm, S), lambda i: (i, 0)),   # x: pipelined over batch
            resident(w1p),                             # weights/biases stay resident
            resident(w2p),
            resident(w3p),
            resident(bias),
        ],
        out_specs=pl.BlockSpec((tm, _LANE), lambda i: (i, 0)),  # lane-dense output
        compiler_params=pltpu.CompilerParams(
            dimension_semantics=("parallel",),         # megacore batch sharding (v7x)
            vmem_limit_bytes=32 * 1024 * 1024),        # big tiles safe on v5e too
    )(x, w1p, w2p, w3p, bias)

    if return_padded:
        # Caller consumes [bp, 128] directly (rows >= B are padding; lanes >=
        # action_size hold -1e30).  Avoids a second full-HBM pass.
        return out_padded
    return out_padded[:B, :action_size]


# ---------------------------------------------------------------------------
# Pure-JAX reference (mirrors the kernel's bf16-operand / f32-accumulate math)
# ---------------------------------------------------------------------------
def qnet_reference(x, params, dueling_agent=False):
    def mm(a, w):
        return jnp.dot(a.astype(jnp.bfloat16), w.astype(jnp.bfloat16),
                       preferred_element_type=jnp.float32)
    h1 = jnp.maximum(mm(x, params["w1"]) + params["b1"], 0.0)
    h2 = jnp.maximum(mm(h1, params["w2"]) + params["b2"], 0.0)
    q = mm(h2, params["w3"]) + params["b3"]
    if dueling_agent:
        q = q + (mm(h2, params["wv"]) + params["bv"])
    return q


if __name__ == "__main__":
    key = jax.random.PRNGKey(0)
    k_param, k_x, k_xg = jax.random.split(key, 3)

    state_size, action_size = 8, 4
    params = init_qnet_params(k_param, state_size, action_size,
                              fc1_units=64, fc2_units=64)

    # Small batch, both dueling modes (Pallas path, single bucket).
    x = jax.random.normal(k_x, (2, state_size), jnp.float32)
    for dueling in (False, True):
        packed = prepare_qnet_params(params, action_size, dueling_agent=dueling)
        q = qnet_forward(x, packed, action_size, dueling_agent=dueling)
        jax.block_until_ready(q)
        q_ref = qnet_reference(x, params, dueling_agent=dueling)
        assert q.shape == q_ref.shape
        assert jnp.allclose(q, q_ref, atol=1e-3, rtol=1e-3), \
            f"mismatch (dueling={dueling})"

    # Larger batch with a multi-block grid (exercises pipelining / parallel axis).
    xg = jax.random.normal(k_xg, (32, state_size), jnp.float32)
    packed = prepare_qnet_params(params, action_size, dueling_agent=True)
    qg = qnet_forward(xg, packed, action_size, dueling_agent=True, block_rows=8)
    jax.block_until_ready(qg)
    qg_ref = qnet_reference(xg, params, dueling_agent=True)
    assert jnp.allclose(qg, qg_ref, atol=1e-3, rtol=1e-3), "grid-batch mismatch"

    # Padded (unsliced) output: valid lanes match, invalid lanes are -1e30.
    qp = qnet_forward(xg, packed, action_size, dueling_agent=True,
                      return_padded=True)
    jax.block_until_ready(qp)
    assert jnp.allclose(qp[:32, :action_size], qg_ref, atol=1e-3, rtol=1e-3)
    assert bool(jnp.all(qp[:32, action_size:] < -1e29)), "lane mask missing"

    # bf16-output option (halved writeback) -- looser tolerance.
    qb = qnet_forward(xg, packed, action_size, dueling_agent=True,
                      out_dtype=jnp.bfloat16)
    jax.block_until_ready(qb)
    assert jnp.allclose(qb.astype(jnp.float32), qg_ref, atol=5e-2, rtol=5e-2), \
        "bf16-output mismatch"

    # B == 1 act-time call uses the plain-XLA fallback.
    q1 = qnet_forward(x[:1], packed, action_size, dueling_agent=True)
    jax.block_until_ready(q1)
    q1_ref = qnet_reference(x[:1], params, dueling_agent=True)
    assert jnp.allclose(q1, q1_ref, atol=1e-3, rtol=1e-3), "B=1 fallback mismatch"

    print("KERNEL_OK")
</pallas_src>

<mosaic_0001>
module attributes {stable_mosaic.version = 11 : i64} {
  func.func @_qnet_kernel(%arg0: i32, %arg1: memref<8x8xf32, #tpu.memory_space<vmem>>, %arg2: memref<8x128xbf16, #tpu.memory_space<vmem>>, %arg3: memref<128x128xbf16, #tpu.memory_space<vmem>>, %arg4: memref<128x128xbf16, #tpu.memory_space<vmem>>, %arg5: memref<3x128xf32, #tpu.memory_space<vmem>>, %arg6: memref<8x128xf32, #tpu.memory_space<vmem>>) attributes {dimension_semantics = [#tpu.dimension_semantics<parallel>], iteration_bounds = array<i64: 1>, scalar_prefetch = 0 : i64, scratch_operands = 0 : i64, tpu.core_type = #tpu.core_type<tc>, window_params = [{transform_indices = @transform_0, window_bounds = array<i64: 8, 8>}, {pipeline_mode = #tpu.pipeline_mode<synchronous>, transform_indices = @transform_1, window_bounds = array<i64: 8, 128>}, {pipeline_mode = #tpu.pipeline_mode<synchronous>, transform_indices = @transform_2, window_bounds = array<i64: 128, 128>}, {pipeline_mode = #tpu.pipeline_mode<synchronous>, transform_indices = @transform_3, window_bounds = array<i64: 128, 128>}, {pipeline_mode = #tpu.pipeline_mode<synchronous>, transform_indices = @transform_4, window_bounds = array<i64: 3, 128>}, {transform_indices = @transform_5, window_bounds = array<i64: 8, 128>}]} {
    %c0 = arith.constant 0 : index
    %c0_0 = arith.constant 0 : index
    %0 = vector.load %arg1[%c0, %c0_0] : memref<8x8xf32, #tpu.memory_space<vmem>>, vector<8x8xf32>
    %1 = arith.truncf %0 : vector<8x8xf32> to vector<8x8xbf16>
    %c0_1 = arith.constant 0 : index
    %c0_2 = arith.constant 0 : index
    %2 = vector.load %arg5[%c0_1, %c0_2] : memref<3x128xf32, #tpu.memory_space<vmem>>, vector<1x128xf32>
    %c1 = arith.constant 1 : index
    %c0_3 = arith.constant 0 : index
    %3 = vector.load %arg5[%c1, %c0_3] : memref<3x128xf32, #tpu.memory_space<vmem>>, vector<1x128xf32>
    %c2 = arith.constant 2 : index
    %c0_4 = arith.constant 0 : index
    %4 = vector.load %arg5[%c2, %c0_4] : memref<3x128xf32, #tpu.memory_space<vmem>>, vector<1x128xf32>
    %c0_5 = arith.constant 0 : index
    %c0_6 = arith.constant 0 : index
    %5 = vector.load %arg2[%c0_5, %c0_6] : memref<8x128xbf16, #tpu.memory_space<vmem>>, vector<8x128xbf16>
    %cst = arith.constant dense<0.000000e+00> : vector<8x128xf32>
    %6 = tpu.matmul %1, %5, %cst {dimension_numbers = #tpu.dot_dimension_numbers<[1], [0], [0], [1], [0, 0, 1, 1], [], []>} : vector<8x8xbf16>, vector<8x128xbf16>, vector<8x128xf32> -> vector<8x128xf32>
    %7 = vector.broadcast %2 : vector<1x128xf32> to vector<8x128xf32>
    %8 = arith.addf %6, %7 : vector<8x128xf32>
    %cst_7 = arith.constant 0.000000e+00 : f32
    %9 = vector.broadcast %cst_7 : f32 to vector<8x128xf32>
    %10 = arith.maximumf %8, %9 : vector<8x128xf32>
    %11 = arith.truncf %10 : vector<8x128xf32> to vector<8x128xbf16>
    %c0_8 = arith.constant 0 : index
    %c0_9 = arith.constant 0 : index
    %12 = vector.load %arg3[%c0_8, %c0_9] : memref<128x128xbf16, #tpu.memory_space<vmem>>, vector<128x128xbf16>
    %cst_10 = arith.constant dense<0.000000e+00> : vector<8x128xf32>
    %13 = tpu.matmul %11, %12, %cst_10 {dimension_numbers = #tpu.dot_dimension_numbers<[1], [0], [0], [1], [0, 0, 1, 1], [], []>} : vector<8x128xbf16>, vector<128x128xbf16>, vector<8x128xf32> -> vector<8x128xf32>
    %14 = vector.broadcast %3 : vector<1x128xf32> to vector<8x128xf32>
    %15 = arith.addf %13, %14 : vector<8x128xf32>
    %cst_11 = arith.constant 0.000000e+00 : f32
    %16 = vector.broadcast %cst_11 : f32 to vector<8x128xf32>
    %17 = arith.maximumf %15, %16 : vector<8x128xf32>
    %18 = arith.truncf %17 : vector<8x128xf32> to vector<8x128xbf16>
    %c0_12 = arith.constant 0 : index
    %c0_13 = arith.constant 0 : index
    %19 = vector.load %arg4[%c0_12, %c0_13] : memref<128x128xbf16, #tpu.memory_space<vmem>>, vector<128x128xbf16>
    %cst_14 = arith.constant dense<0.000000e+00> : vector<8x128xf32>
    %20 = tpu.matmul %18, %19, %cst_14 {dimension_numbers = #tpu.dot_dimension_numbers<[1], [0], [0], [1], [0, 0, 1, 1], [], []>} : vector<8x128xbf16>, vector<128x128xbf16>, vector<8x128xf32> -> vector<8x128xf32>
    %21 = vector.broadcast %4 : vector<1x128xf32> to vector<8x128xf32>
    %22 = arith.addf %20, %21 : vector<8x128xf32>
    %23 = tpu.iota {dimensions = array<i32: 1>} : vector<1x128xi32>
    %c4_i32 = arith.constant 4 : i32
    %24 = vector.broadcast %c4_i32 : i32 to vector<1x128xi32>
    %25 = arith.cmpi slt, %23, %24 : vector<1x128xi32>
    %cst_15 = arith.constant -1.000000e+30 : f32
    %26 = vector.shape_cast %25 : vector<1x128xi1> to vector<1x128xi1>
    %27 = vector.broadcast %26 : vector<1x128xi1> to vector<8x128xi1>
    %28 = vector.broadcast %cst_15 : f32 to vector<8x128xf32>
    %29 = arith.select %27, %22, %28 : vector<8x128xi1>, vector<8x128xf32>
    %c0_16 = arith.constant 0 : index
    %c0_17 = arith.constant 0 : index
    %30 = vector.load %arg6[%c0_16, %c0_17] : memref<8x128xf32, #tpu.memory_space<vmem>>, vector<8x128xf32>
    tpu.vector_store %arg6[%c0_16, %c0_17], %29 {strides = array<i32>} : memref<8x128xf32, #tpu.memory_space<vmem>>, vector<8x128xf32>,
    return
  }
  func.func @transform_0(%arg0: i32) -> (i32, i32) {
    %c0_i32 = arith.constant 0 : i32
    %c0_i32_0 = arith.constant 0 : i32
    return %arg0, %c0_i32 : i32, i32
  }
  func.func @transform_1(%arg0: i32) -> (i32, i32) {
    %c0_i32 = arith.constant 0 : i32
    %c0_i32_0 = arith.constant 0 : i32
    %c0_i32_1 = arith.constant 0 : i32
    return %c0_i32, %c0_i32_0 : i32, i32
  }
  func.func @transform_2(%arg0: i32) -> (i32, i32) {
    %c0_i32 = arith.constant 0 : i32
    %c0_i32_0 = arith.constant 0 : i32
    %c0_i32_1 = arith.constant 0 : i32
    return %c0_i32, %c0_i32_0 : i32, i32
  }
  func.func @transform_3(%arg0: i32) -> (i32, i32) {
    %c0_i32 = arith.constant 0 : i32
    %c0_i32_0 = arith.constant 0 : i32
    %c0_i32_1 = arith.constant 0 : i32
    return %c0_i32, %c0_i32_0 : i32, i32
  }
  func.func @transform_4(%arg0: i32) -> (i32, i32) {
    %c0_i32 = arith.constant 0 : i32
    %c0_i32_0 = arith.constant 0 : i32
    %c0_i32_1 = arith.constant 0 : i32
    return %c0_i32, %c0_i32_0 : i32, i32
  }
  func.func @transform_5(%arg0: i32) -> (i32, i32) {
    %c0_i32 = arith.constant 0 : i32
    %c0_i32_0 = arith.constant 0 : i32
    return %arg0, %c0_i32 : i32, i32
  }
}

</mosaic_0001>

<llo_original>
// kernel: tpu_custom_call.1
$region0: #{tpu_custom_call.1}
  #allocation0 [shape = 'u32[]', space=smem, size = 0x4, offset = 0x4, fixed_abs, tag = 'smem constant byte address 0x4 - core index']
  #allocation1 [shape = 'u32[144,128]{1,0:T(1,128)}', space=vmem, size = 0x12000, scoped, tag = 'internal scratch']
  %s0 = inlined_call_operand.hbm [shape: f32[8,8], index: 0, kind: input, shape index: {}]
  %s1 = inlined_call_operand.hbm [shape: bf16[8,128], index: 1, kind: input, shape index: {}]
  %s2 = inlined_call_operand.hbm [shape: bf16[128,128], index: 2, kind: input, shape index: {}]
  %s3 = inlined_call_operand.hbm [shape: bf16[128,128], index: 3, kind: input, shape index: {}]
  %s4 = inlined_call_operand.vmem [shape: f32[3,128], index: 4, kind: input, shape index: {}]
  %s5 = inlined_call_operand.hbm [shape: f32[8,128], index: 5, kind: output, shape index: {}]
  %s6 = sld [smem:[#allocation0]]
  $region46: #{tpu_custom_call.1} parent=0
    _
  %s8 = ssub.s32 1, %s6
  %s9 = scalar_select 0, %s8, %s6
  $region1: #{tpu_custom_call.1} parent=0
    #allocation2 [shape = 'u8[4096]{0}', space=vmem, size = 0x1000, scoped, tag = 'input window, operand 0, single buffered']
    #allocation3 [shape = 's32[1]{0}', space=sflag, size = 0x4, scoped, tag = 'scoped memory for tpu_custom_call.1']
    #allocation4 [shape = 's32[1]{0}', space=sflag, size = 0x4, scoped, tag = 'scoped memory for tpu_custom_call.1']
    #allocation5 [shape = 'u8[2048]{0}', space=vmem, size = 0x800, scoped, tag = 'input window, operand 1, single buffered']
    #allocation6 [shape = 's32[1]{0}', space=sflag, size = 0x4, scoped, tag = 'scoped memory for tpu_custom_call.1']
    #allocation7 [shape = 'u8[32768]{0}', space=vmem, size = 0x8000, scoped, tag = 'input window, operand 2, single buffered']
    #allocation8 [shape = 'u8[32768]{0}', space=vmem, size = 0x8000, scoped, tag = 'input window, operand 3, single buffered']
    #allocation9 [shape = 's32[1]{0}', space=sflag, size = 0x4, scoped, tag = 'scoped memory for tpu_custom_call.1']
    #allocation10 [shape = 'u8[4096]{0}', space=vmem, size = 0x1000, scoped, tag = 'output window, operand 0, single buffered']
    %10 = vsyncpa [#allocation3], 0
    %11 = vsyncpa [#allocation6], 0
    %12 = vsyncpa [#allocation9], 0
    %13 = vsyncpa [#allocation4], 0
    // Predicated region
    $region2: #{tpu_custom_call.1} parent=1 // pred_check
      _
    $region3: #{tpu_custom_call.1} parent=1 // pred_check_branch
      %15 = sbr.rel (0) target = $region5
    $region4: #{tpu_custom_call.1} parent=1 // pred_region
      %s17 = ssub.s32 128, 128
      %18 = vsyncadd [#allocation3], %s17
      %s20 = sshll.u32 [#allocation2], 4
      %s21 = int_to_ptr.vmem [resolvable:$true] %s20
      %23 = dma.hbm_to_vmem [thread:$0]  %s0, 128, %s21, [#allocation3]
    $region5: #{tpu_custom_call.1} parent=1 // pred_fallthru
      _
    // Predicated region
    $region6: #{tpu_custom_call.1} parent=1 // pred_check
      _
    $region7: #{tpu_custom_call.1} parent=1 // pred_check_branch
      %25 = sbr.rel (0) target = $region9
    $region8: #{tpu_custom_call.1} parent=1 // pred_region
      %s27 = ssub.s32 64, 64
      %28 = vsyncadd [#allocation6], %s27
      %s30 = sshll.u32 [#allocation5], 4
      %s31 = int_to_ptr.vmem [resolvable:$true] %s30
      %33 = dma.hbm_to_vmem [thread:$0]  %s1, 64, %s31, [#allocation6]
    $region9: #{tpu_custom_call.1} parent=1 // pred_fallthru
      _
    // Predicated region
    $region10: #{tpu_custom_call.1} parent=1 // pred_check
      _
    $region11: #{tpu_custom_call.1} parent=1 // pred_check_branch
      %35 = sbr.rel (0) target = $region13
    $region12: #{tpu_custom_call.1} parent=1 // pred_region
      %s37 = ssub.s32 1024, 1024
      %38 = vsyncadd [#allocation6], %s37
      %s39 = sshll.u32 [#allocation7], 4
      %s40 = int_to_ptr.vmem [resolvable:$true] %s39
      %45 = dma.hbm_to_vmem [thread:$0]  %s2, 1024, %s40, [#allocation6], 64, 64, 4
    $region13: #{tpu_custom_call.1} parent=1 // pred_fallthru
      _
    // Predicated region
    $region14: #{tpu_custom_call.1} parent=1 // pred_check
      _
    $region15: #{tpu_custom_call.1} parent=1 // pred_check_branch
      %47 = sbr.rel (0) target = $region17
    $region16: #{tpu_custom_call.1} parent=1 // pred_region
      %s49 = ssub.s32 1024, 1024
      %50 = vsyncadd [#allocation9], %s49
      %s51 = sshll.u32 [#allocation8], 4
      %s52 = int_to_ptr.vmem [resolvable:$true] %s51
      %57 = dma.hbm_to_vmem [thread:$0]  %s3, 1024, %s52, [#allocation9], 64, 64, 4
    $region17: #{tpu_custom_call.1} parent=1 // pred_fallthru
      _
    // Predicated region
    $region18: #{tpu_custom_call.1} parent=1 // pred_check
      _
    $region19: #{tpu_custom_call.1} parent=1 // pred_check_branch
      %59 = sbr.rel (0) target = $region21
    $region20: #{tpu_custom_call.1} parent=1 // pred_region
      _
    $region21: #{tpu_custom_call.1} parent=1 // pred_fallthru
      _
    // Predicated region
    $region22: #{tpu_custom_call.1} parent=1 // pred_check
      _
    $region23: #{tpu_custom_call.1} parent=1 // pred_check_branch
      %61 = sbr.rel (0) target = $region25
    $region24: #{tpu_custom_call.1} parent=1 // pred_region
      %62 = dma.done [#allocation3], 128
    $region25: #{tpu_custom_call.1} parent=1 // pred_fallthru
      _
    // Predicated region
    $region26: #{tpu_custom_call.1} parent=1 // pred_check
      _
    $region27: #{tpu_custom_call.1} parent=1 // pred_check_branch
      %64 = sbr.rel (0) target = $region29
    $region28: #{tpu_custom_call.1} parent=1 // pred_region
      %65 = dma.done [#allocation6], 64
    $region29: #{tpu_custom_call.1} parent=1 // pred_fallthru
      _
    // Predicated region
    $region30: #{tpu_custom_call.1} parent=1 // pred_check
      _
    $region31: #{tpu_custom_call.1} parent=1 // pred_check_branch
      %67 = sbr.rel (0) target = $region33
    $region32: #{tpu_custom_call.1} parent=1 // pred_region
      %68 = dma.done [#allocation6], 1024
    $region33: #{tpu_custom_call.1} parent=1 // pred_fallthru
      _
    // Predicated region
    $region34: #{tpu_custom_call.1} parent=1 // pred_check
      _
    $region35: #{tpu_custom_call.1} parent=1 // pred_check_branch
      %70 = sbr.rel (0) target = $region37
    $region36: #{tpu_custom_call.1} parent=1 // pred_region
      %71 = dma.done [#allocation9], 1024
    $region37: #{tpu_custom_call.1} parent=1 // pred_fallthru
      _
    %v73 = vld [vmem:[#allocation2] sm:$0xff]
    %v74 = vpack.c.bf16 %v73, %v73
    %v75 = vld [vmem:[%s4] sm:$0x1]
    %v76 = vld [vmem:[%s4 + $0x1] sm:$0x1]
    %v77 = vld [vmem:[%s4 + $0x2] sm:$0x1]
    %v78 = vld [vmem:[#allocation5] sm:$0xf]
    %v79 = vlaneseq
    %v80 = vshrl.u32 %v79, 7
    %v81 = vsub.s32 0, %v80
    %v82 = vrot.slane %v75, %v81
    %vm83 = vcmask 64512
    %v85 = vsel %vm83, %v74, 0
    %vm87 = vcmask 1043456
    %v89 = vsel %vm87, %v78, 0
    %91 = vmatprep.subr.bf16.mxu0 0
    %92 = vmatpush1.bf16.msra.mxu0 %v89
    %93 = vmatprep.subr.bf16.mxu0 0
    %94 = vmatpush1.bf16.msra.mxu0 0
    %95 = vmatprep.subr.bf16.mxu0 0
    %96 = vmatpush1.bf16.msra.mxu0 0
    %97 = vmatprep.subr.bf16.mxu0 0
    %98 = vmatpush1.bf16.msra.mxu0 0
    %99 = vmatprep.subr.bf16.mxu0 0
    %100 = vmatpush1.bf16.msra.mxu0 0
    %101 = vmatprep.subr.bf16.mxu0 0
    %102 = vmatpush1.bf16.msra.mxu0 0
    %103 = vmatprep.subr.bf16.mxu0 0
    %104 = vmatpush1.bf16.msra.mxu0 0
    %105 = vmatprep.subr.bf16.mxu0 0
    %106 = vmatpush1.bf16.msra.mxu0 0
    %107 = vmatprep.subr.bf16.mxu0 0
    %108 = vmatpush1.bf16.msra.mxu0 0
    %109 = vmatprep.subr.bf16.mxu0 0
    %110 = vmatpush1.bf16.msra.mxu0 0
    %111 = vmatprep.subr.bf16.mxu0 0
    %112 = vmatpush1.bf16.msra.mxu0 0
    %113 = vmatprep.subr.bf16.mxu0 0
    %114 = vmatpush1.bf16.msra.mxu0 0
    %115 = vmatprep.subr.bf16.mxu0 0
    %116 = vmatpush1.bf16.msra.mxu0 0
    %117 = vmatprep.subr.bf16.mxu0 0
    %118 = vmatpush1.bf16.msra.mxu0 0
    %119 = vmatprep.subr.bf16.mxu0 0
    %120 = vmatpush1.bf16.msra.mxu0 0
    %121 = vmatprep.subr.bf16.mxu0 0
    %122 = vmatpush1.bf16.msra.mxu0 0
    %123 = vmatprep.mubr.bf16.mxu0 0
    %124 = vmatmul.mubr.bf16.gmra.mrb[0].mxu0 %v85
    %v125 = vpop.f32.mrb[0].mxu0
    %v126 = vadd.f32 %v82, %v125
    %v127 = vpop.f32.mrb[0].mxu0
    %v128 = vpop.f32.mrb[0].mxu0
    %v129 = vpop.f32.mrb[0].mxu0
    %130 = vdwg.mxu0
    %v131 = vmax.f32 %v126, 0.0
    %v132 = vpack.c.bf16 %v131, %v131
    %v133 = vld [vmem:[#allocation7] sm:$0xf]
    %v134 = vld [vmem:[#allocation7 + $0x4] sm:$0xf]
    %v135 = vld [vmem:[#allocation7 + $0x8] sm:$0xf]
    %v136 = vld [vmem:[#allocation7 + $0xc] sm:$0xf]
    %v137 = vld [vmem:[#allocation7 + $0x10] sm:$0xf]
    %v138 = vld [vmem:[#allocation7 + $0x14] sm:$0xf]
    %v139 = vld [vmem:[#allocation7 + $0x18] sm:$0xf]
    %v140 = vld [vmem:[#allocation7 + $0x1c] sm:$0xf]
    %v141 = vld [vmem:[#allocation7 + $0x20] sm:$0xf]
    %v142 = vld [vmem:[#allocation7 + $0x24] sm:$0xf]
    %v143 = vld [vmem:[#allocation7 + $0x28] sm:$0xf]
    %v144 = vld [vmem:[#allocation7 + $0x2c] sm:$0xf]
    %v145 = vld [vmem:[#allocation7 + $0x30] sm:$0xf]
    %v146 = vld [vmem:[#allocation7 + $0x34] sm:$0xf]
    %v147 = vld [vmem:[#allocation7 + $0x38] sm:$0xf]
    %v148 = vld [vmem:[#allocation7 + $0x3c] sm:$0xf]
    %v149 = vlaneseq
    %v150 = vshrl.u32 %v149, 7
    %v151 = vsub.s32 0, %v150
    %v152 = vrot.slane %v76, %v151
    %v169 = vunpack.c.l.b16 %v133
    %v170 = vunpack.c.l.b16 %v134
    %v171 = vunpack.c.l.b16 %v135
    %v172 = vunpack.c.l.b16 %v136
    %v173 = vunpack.c.l.b16 %v137
    %v174 = vunpack.c.l.b16 %v138
    %v175 = vunpack.c.l.b16 %v139
    %v176 = vunpack.c.l.b16 %v140
    %v177 = vunpack.c.l.b16 %v141
    %v178 = vunpack.c.l.b16 %v142
    %v179 = vunpack.c.l.b16 %v143
    %v180 = vunpack.c.l.b16 %v144
    %v181 = vunpack.c.l.b16 %v145
    %v182 = vunpack.c.l.b16 %v146
    %v183 = vunpack.c.l.b16 %v147
    %v184 = vunpack.c.l.b16 %v148
    %v185 = vpack.c.b16 %v170, %v169
    %v186 = vpack.c.b16 %v172, %v171
    %v187 = vpack.c.b16 %v174, %v173
    %v188 = vpack.c.b16 %v176, %v175
    %v189 = vpack.c.b16 %v178, %v177
    %v190 = vpack.c.b16 %v180, %v179
    %v191 = vpack.c.b16 %v182, %v181
    %v192 = vpack.c.b16 %v184, %v183
    %201 = vmatprep.subr.bf16.mxu0 0
    %202 = vmatpush1.bf16.msra.mxu0 %v185
    %203 = vmatprep.subr.bf16.mxu0 0
    %204 = vmatpush1.bf16.msra.mxu0 %v186
    %205 = vmatprep.subr.bf16.mxu0 0
    %206 = vmatpush1.bf16.msra.mxu0 %v187
    %207 = vmatprep.subr.bf16.mxu0 0
    %208 = vmatpush1.bf16.msra.mxu0 %v188
    %209 = vmatprep.subr.bf16.mxu0 0
    %210 = vmatpush1.bf16.msra.mxu0 %v189
    %211 = vmatprep.subr.bf16.mxu0 0
    %212 = vmatpush1.bf16.msra.mxu0 %v190
    %213 = vmatprep.subr.bf16.mxu0 0
    %214 = vmatpush1.bf16.msra.mxu0 %v191
    %215 = vmatprep.subr.bf16.mxu0 0
    %216 = vmatpush1.bf16.msra.mxu0 %v192
    %217 = vmatprep.subr.bf16.mxu0 0
    %218 = vmatpush1.bf16.msra.mxu0 0
    %219 = vmatprep.subr.bf16.mxu0 0
    %220 = vmatpush1.bf16.msra.mxu0 0
    %221 = vmatprep.subr.bf16.mxu0 0
    %222 = vmatpush1.bf16.msra.mxu0 0
    %223 = vmatprep.subr.bf16.mxu0 0
    %224 = vmatpush1.bf16.msra.mxu0 0
    %225 = vmatprep.subr.bf16.mxu0 0
    %226 = vmatpush1.bf16.msra.mxu0 0
    %227 = vmatprep.subr.bf16.mxu0 0
    %228 = vmatpush1.bf16.msra.mxu0 0
    %229 = vmatprep.subr.bf16.mxu0 0
    %230 = vmatpush1.bf16.msra.mxu0 0
    %231 = vmatprep.subr.bf16.mxu0 0
    %232 = vmatpush1.bf16.msra.mxu0 0
    %233 = vmatprep.mubr.bf16.mxu0 0
    %234 = vmatmul.mubr.bf16.gmra.mrb[0].mxu0 %v132
    %v235 = vpop.f32.mrb[0].mxu0
    %v236 = vadd.f32 %v152, %v235
    %v237 = vpop.f32.mrb[0].mxu0
    %v238 = vpop.f32.mrb[0].mxu0
    %v239 = vpop.f32.mrb[0].mxu0
    %240 = vdwg.mxu0
    %v241 = vmax.f32 %v236, 0.0
    %v242 = vpack.c.bf16 %v241, %v241
    %v243 = vld [vmem:[#allocation8] sm:$0xf]
    %v244 = vld [vmem:[#allocation8 + $0x4] sm:$0xf]
    %v245 = vld [vmem:[#allocation8 + $0x8] sm:$0xf]
    %v246 = vld [vmem:[#allocation8 + $0xc] sm:$0xf]
    %v247 = vld [vmem:[#allocation8 + $0x10] sm:$0xf]
    %v248 = vld [vmem:[#allocation8 + $0x14] sm:$0xf]
    %v249 = vld [vmem:[#allocation8 + $0x18] sm:$0xf]
    %v250 = vld [vmem:[#allocation8 + $0x1c] sm:$0xf]
    %v251 = vld [vmem:[#allocation8 + $0x20] sm:$0xf]
    %v252 = vld [vmem:[#allocation8 + $0x24] sm:$0xf]
    %v253 = vld [vmem:[#allocation8 + $0x28] sm:$0xf]
    %v254 = vld [vmem:[#allocation8 + $0x2c] sm:$0xf]
    %v255 = vld [vmem:[#allocation8 + $0x30] sm:$0xf]
    %v256 = vld [vmem:[#allocation8 + $0x34] sm:$0xf]
    %v257 = vld [vmem:[#allocation8 + $0x38] sm:$0xf]
    %v258 = vld [vmem:[#allocation8 + $0x3c] sm:$0xf]
    %v259 = vlaneseq
    %v260 = vshrl.u32 %v259, 7
    %v261 = vsub.s32 0, %v260
    %v262 = vrot.slane %v77, %v261
    %v279 = vunpack.c.l.b16 %v243
    %v280 = vunpack.c.l.b16 %v244
    %v281 = vunpack.c.l.b16 %v245
    %v282 = vunpack.c.l.b16 %v246
    %v283 = vunpack.c.l.b16 %v247
    %v284 = vunpack.c.l.b16 %v248
    %v285 = vunpack.c.l.b16 %v249
    %v286 = vunpack.c.l.b16 %v250
    %v287 = vunpack.c.l.b16 %v251
    %v288 = vunpack.c.l.b16 %v252
    %v289 = vunpack.c.l.b16 %v253
    %v290 = vunpack.c.l.b16 %v254
    %v291 = vunpack.c.l.b16 %v255
    %v292 = vunpack.c.l.b16 %v256
    %v293 = vunpack.c.l.b16 %v257
    %v294 = vunpack.c.l.b16 %v258
    %v295 = vpack.c.b16 %v280, %v279
    %v296 = vpack.c.b16 %v282, %v281
    %v297 = vpack.c.b16 %v284, %v283
    %v298 = vpack.c.b16 %v286, %v285
    %v299 = vpack.c.b16 %v288, %v287
    %v300 = vpack.c.b16 %v290, %v289
    %v301 = vpack.c.b16 %v292, %v291
    %v302 = vpack.c.b16 %v294, %v293
    %311 = vmatprep.subr.bf16.mxu0 0
    %312 = vmatpush1.bf16.msra.mxu0 %v295
    %313 = vmatprep.subr.bf16.mxu0 0
    %314 = vmatpush1.bf16.msra.mxu0 %v296
    %315 = vmatprep.subr.bf16.mxu0 0
    %316 = vmatpush1.bf16.msra.mxu0 %v297
    %317 = vmatprep.subr.bf16.mxu0 0
    %318 = vmatpush1.bf16.msra.mxu0 %v298
    %319 = vmatprep.subr.bf16.mxu0 0
    %320 = vmatpush1.bf16.msra.mxu0 %v299
    %321 = vmatprep.subr.bf16.mxu0 0
    %322 = vmatpush1.bf16.msra.mxu0 %v300
    %323 = vmatprep.subr.bf16.mxu0 0
    %324 = vmatpush1.bf16.msra.mxu0 %v301
    %325 = vmatprep.subr.bf16.mxu0 0
    %326 = vmatpush1.bf16.msra.mxu0 %v302
    %327 = vmatprep.subr.bf16.mxu0 0
    %328 = vmatpush1.bf16.msra.mxu0 0
    %329 = vmatprep.subr.bf16.mxu0 0
    %330 = vmatpush1.bf16.msra.mxu0 0
    %331 = vmatprep.subr.bf16.mxu0 0
    %332 = vmatpush1.bf16.msra.mxu0 0
    %333 = vmatprep.subr.bf16.mxu0 0
    %334 = vmatpush1.bf16.msra.mxu0 0
    %335 = vmatprep.subr.bf16.mxu0 0
    %336 = vmatpush1.bf16.msra.mxu0 0
    %337 = vmatprep.subr.bf16.mxu0 0
    %338 = vmatpush1.bf16.msra.mxu0 0
    %339 = vmatprep.subr.bf16.mxu0 0
    %340 = vmatpush1.bf16.msra.mxu0 0
    %341 = vmatprep.subr.bf16.mxu0 0
    %342 = vmatpush1.bf16.msra.mxu0 0
    %343 = vmatprep.mubr.bf16.mxu0 0
    %344 = vmatmul.mubr.bf16.gmra.mrb[0].mxu0 %v242
    %v345 = vpop.f32.mrb[0].mxu0
    %v346 = vadd.f32 %v262, %v345
    %v347 = vpop.f32.mrb[0].mxu0
    %v348 = vpop.f32.mrb[0].mxu0
    %v349 = vpop.f32.mrb[0].mxu0
    %350 = vdwg.mxu0
    %v351 = vlaneseq
    %v352 = vand.u32 %v351, 127
    %vm353 = vcmp.lt.s32.totalorder %v352, 4
    %v354 = vsel %vm353, 1, 0
    %vm355 = vcmp.eq.s32.totalorder %v354, 1
    %v356 = vsel %vm355, %v346, -1e+30
    %357 = vst [vmem:[#allocation10] sm:$0xff] %v356
    // Predicated region
    $region38: #{tpu_custom_call.1} parent=1 // pred_check
      _
    $region39: #{tpu_custom_call.1} parent=1 // pred_check_branch
      %359 = sbr.rel (0) target = $region41
    $region40: #{tpu_custom_call.1} parent=1 // pred_region
      %s361 = ssub.s32 128, 128
      %362 = vsyncadd [#allocation4], %s361
      %s364 = sshll.u32 [#allocation10], 4
      %s365 = int_to_ptr.vmem [resolvable:$true] %s364
      %367 = dma.vmem_to_hbm [thread:$0]  %s365, 128, %s5, [#allocation4]
    $region41: #{tpu_custom_call.1} parent=1 // pred_fallthru
      _
    // Predicated region
    $region42: #{tpu_custom_call.1} parent=1 // pred_check
      _
    $region43: #{tpu_custom_call.1} parent=1 // pred_check_branch
      %369 = sbr.rel (0) target = $region45
    $region44: #{tpu_custom_call.1} parent=1 // pred_region
      %370 = dma.done [#allocation4], 128
    $region45: #{tpu_custom_call.1} parent=1 // pred_fallthru
      _
    %371 = vsyncpa [#allocation3], 1
    %372 = vsyncpa [#allocation6], 1
    %373 = vsyncpa [#allocation9], 1
    %374 = vsyncpa [#allocation4], 1

</llo_original>
